<compile_context>
chip_gen: v6e
topology: v6e:2x2x1
jax: 0.10.0
libtpu: 0.0.40
codegen_flags: <defaults>
</compile_context>

<pallas_src>
import functools

import jax
import jax.numpy as jnp
from jax.experimental import pallas as pl
from jax.experimental.pallas import tpu as pltpu

_HALO_BLK = 128          # lane-aligned halo operand width (time columns)
_IM2COL_MAX_CIN = 128    # below this, stack K taps into one MXU contraction


# ----------------------------------------------------------------------------
# Fused JasperBlock kernel (one batch element x one time tile per grid step)
# ----------------------------------------------------------------------------
def _jasper_block_kernel(lens_ref, xl_ref, x_ref, xr_ref, *refs,
                         rep, K, cins, has_res, Tt, halo, use_scratch,
                         compute_dtype):
    """lens_ref: (B,) i32 SMEM (scalar prefetch).
    xl_ref/xr_ref : (1, Cin, 128) left/right neighbour blocks (clamped).
    x_ref         : (1, Cin, Tt)  current time tile.
    refs          : rep*(w_mat, shift) [+ (w_res, shift_res)] + (o_ref,)
                    [+ (xcol_scratch,)]
    """
    if use_scratch:
        xcol_ref = refs[-1]
        refs = refs[:-1]
    o_ref = refs[-1]
    wrefs = refs[:-1]
    conv_w = [wrefs[2 * r] for r in range(rep)]
    conv_sh = [wrefs[2 * r + 1] for r in range(rep)]
    if has_res:
        w_res = wrefs[2 * rep]
        sh_res = wrefs[2 * rep + 1]

    b = pl.program_id(0)
    t = pl.program_id(1)
    L = lens_ref[b]
    pad = (K - 1) // 2
    t0 = t * Tt                          # absolute time of tile column 0

    # Haloed input slab: concatenate at lane-aligned offsets (128, Tt, 128),
    # then one static slice extracts [t0 - halo, t0 + Tt + halo).  Edge tiles
    # get junk halo columns from the clamped neighbour blocks; they are
    # zeroed by the absolute-time mask below.
    if halo > 0:
        big = jnp.concatenate([xl_ref[0], x_ref[0], xr_ref[0]], axis=1)
        cur = big[:, _HALO_BLK - halo:_HALO_BLK + Tt + halo]
    else:
        cur = x_ref[0]
    cur = cur.astype(compute_dtype)

    out = None
    for r in range(rep):                 # static unroll over repeats
        cin = cins[r]
        w_in = Tt + 2 * (rep - r) * pad  # current slab width
        w_out = w_in - 2 * pad           # 'valid' conv output width
        base = t0 - (rep - r) * pad      # absolute time of slab column 0
        idx = base + jax.lax.broadcasted_iota(jnp.int32, (1, w_in), 1)
        # conv_mask=True: zero every conv *input* at t < 0 ('same' padding
        # region) or t >= length.  Stays in compute_dtype (bf16 on v6e/v7x).
        xm = jnp.where((idx >= 0) & (idx < L), cur, 0).astype(compute_dtype)

        if cin < _IM2COL_MAX_CIN:
            # Small-Cin: stack K shifted taps along the contraction axis in a
            # VMEM scratch -> one (Cout, K*Cin) @ (K*Cin, w_out) MXU matmul.
            for k in range(K):
                xcol_ref[k * cin:(k + 1) * cin, :w_out] = xm[:, k:k + w_out]
            acc = jnp.dot(conv_w[r][...], xcol_ref[0:K * cin, 0:w_out],
                          preferred_element_type=jnp.float32)
        else:
            # Large-Cin (v7x VMEM): accumulate taps, no K*Cin slab blow-up.
            acc = jnp.dot(conv_w[r][:, 0:cin], xm[:, 0:w_out],
                          preferred_element_type=jnp.float32)
            for k in range(1, K):
                acc = acc + jnp.dot(conv_w[r][:, k * cin:(k + 1) * cin],
                                    xm[:, k:k + w_out],
                                    preferred_element_type=jnp.float32)

        acc = acc + conv_sh[r][...]      # folded BN shift (f32 epilogue)
        last = r == rep - 1
        if (not last) or (not has_res):
            acc = jnp.maximum(acc, 0.0)  # block activation (ReLU)
        if not last:
            cur = acc.astype(compute_dtype)   # bf16 intermediates on v6e/v7x
        else:
            out = acc                    # f32, width exactly Tt

    if has_res:
        # residual_mode='add': 1x1 masked conv on the block input + BN shift,
        # then ReLU after the add.
        mid_idx = t0 + jax.lax.broadcasted_iota(jnp.int32, (1, Tt), 1)
        res_in = jnp.where(mid_idx < L, x_ref[0].astype(compute_dtype), 0)
        res = jnp.dot(w_res[...], res_in,
                      preferred_element_type=jnp.float32) + sh_res[...]
        out = jnp.maximum(out + res, 0.0)

    o_ref[0] = out.astype(o_ref.dtype)


# ----------------------------------------------------------------------------
# Host-side weight preparation (hoisted out of the per-call wrapper)
# ----------------------------------------------------------------------------
def prepare_jasper_block(block_params, *, compute_dtype=jnp.float32):
    """Fold BN scale into conv weights, pre-transpose to (Cout, K*Cin)."""
    convs = block_params["convs"]
    K = block_params["kernel"]
    w_mats, shifts, cins = [], [], []
    for (w, sc, sh) in convs:
        co, ci, k = w.shape
        w_fold = w * sc[:, None, None]
        # (Cout, Cin, K) -> (Cout, K, Cin) -> (Cout, K*Cin): column k*Cin+ci
        # matches the in-kernel tap stacking order.
        w_mat = jnp.transpose(w_fold, (0, 2, 1)).reshape(co, k * ci)
        w_mats.append(w_mat.astype(compute_dtype))
        shifts.append(sh.reshape(co, 1).astype(jnp.float32))
        cins.append(ci)
    prep = dict(kernel=K, rep=len(convs), cins=tuple(cins),
                cout=convs[-1][0].shape[0], w_mats=w_mats, shifts=shifts,
                res_w=None, res_shift=None)
    if block_params["res"] is not None:
        wr, scr, shr = block_params["res"]
        co = wr.shape[0]
        prep["res_w"] = (wr[:, :, 0] * scr[:, None]).astype(compute_dtype)
        prep["res_shift"] = shr.reshape(co, 1).astype(jnp.float32)
    return prep


# ----------------------------------------------------------------------------
# Per-block wrapper
# ----------------------------------------------------------------------------
def jasper_block_forward(x, lens, prep, *, t_tile=512,
                         compute_dtype=jnp.float32, out_dtype=None):
    """x: (B, Cin, T), lens: (B,) i32.  Returns (B, Cout, T)."""
    B, Cin, T = x.shape
    rep, K = prep["rep"], prep["kernel"]
    cins, Cout = prep["cins"], prep["cout"]
    has_res = prep["res_w"] is not None
    out_dtype = out_dtype or x.dtype
    pad = (K - 1) // 2
    halo = rep * pad
    assert K % 2 == 1, "only odd kernel sizes ('same' padding) supported"
    assert cins[0] == Cin

    Tt = min(t_tile, T)
    assert T % 128 == 0 and Tt % 128 == 0 and T % Tt == 0, (
        "T and the time tile must be multiples of 128")
    # TODO(synk): support a ragged T tail via a BoundedSlice / masked tile.
    assert 0 <= halo <= _HALO_BLK and halo <= Tt
    nT = T // Tt
    r128 = Tt // _HALO_BLK
    nblk = T // _HALO_BLK

    operands = [lens, x, x, x]
    in_specs = [
        pl.BlockSpec((1, Cin, _HALO_BLK),
                     lambda b, t, _l: (b, 0, jnp.maximum(t * r128 - 1, 0))),
        pl.BlockSpec((1, Cin, Tt), lambda b, t, _l: (b, 0, t)),
        pl.BlockSpec((1, Cin, _HALO_BLK),
                     lambda b, t, _l: (b, 0,
                                       jnp.minimum((t + 1) * r128, nblk - 1))),
    ]
    for w_mat, sh in zip(prep["w_mats"], prep["shifts"]):
        operands += [w_mat, sh]
        in_specs += [pl.BlockSpec(w_mat.shape, lambda b, t, _l: (0, 0)),
                     pl.BlockSpec(sh.shape, lambda b, t, _l: (0, 0))]
    if has_res:
        operands += [prep["res_w"], prep["res_shift"]]
        in_specs += [
            pl.BlockSpec(prep["res_w"].shape, lambda b, t, _l: (0, 0)),
            pl.BlockSpec(prep["res_shift"].shape, lambda b, t, _l: (0, 0))]

    use_scratch = any(c < _IM2COL_MAX_CIN for c in cins)
    scratch_shapes = []
    if use_scratch:
        cmax = max(c for c in cins if c < _IM2COL_MAX_CIN)
        w_scr = ((Tt + 2 * halo + 127) // 128) * 128
        scratch_shapes.append(pltpu.VMEM((K * cmax, w_scr), compute_dtype))

    kernel = functools.partial(
        _jasper_block_kernel, rep=rep, K=K, cins=cins, has_res=has_res,
        Tt=Tt, halo=halo, use_scratch=use_scratch,
        compute_dtype=compute_dtype)

    return pl.pallas_call(
        kernel,
        out_shape=jax.ShapeDtypeStruct((B, Cout, T), out_dtype),
        grid_spec=pltpu.PrefetchScalarGridSpec(
            num_scalar_prefetch=1,
            grid=(B, nT),
            in_specs=in_specs,
            out_specs=pl.BlockSpec((1, Cout, Tt), lambda b, t, _l: (b, 0, t)),
            scratch_shapes=scratch_shapes),
        compiler_params=pltpu.CompilerParams(
            dimension_semantics=("parallel", "parallel"),
            vmem_limit_bytes=48 * 1024 * 1024),
    )(*operands)


def _update_lens(lens, K, stride=1, dilation=1):
    # MaskedConv1d.get_seq_len with "same"-style padding.
    pad = (K - 1) // 2 * dilation
    return (lens + 2 * pad - dilation * (K - 1) - 1) // stride + 1


# ----------------------------------------------------------------------------
# Synthetic ConvASREncoder: config, params, forward
# ----------------------------------------------------------------------------
JASPER_CFG = [
    dict(filters=32, repeat=1, kernel=3, residual=False),
    dict(filters=32, repeat=2, kernel=3, residual=True),
    dict(filters=64, repeat=2, kernel=5, residual=True),
]


def _xavier_uniform(key, shape):
    cout, cin, k = shape
    bound = (6.0 / (cin * k + cout * k)) ** 0.5
    return jax.random.uniform(key, shape, jnp.float32, -bound, bound)


def _bn_affine(cout, eps=1e-5):
    # Eval-mode BatchNorm1d, default init: gamma=1, beta=0, mean=0, var=1.
    scale = jnp.full((cout,), 1.0 / jnp.sqrt(1.0 + eps), jnp.float32)
    shift = jnp.zeros((cout,), jnp.float32)
    return scale, shift


def init_params(key, feat_in, cfg):
    params = []
    cin = feat_in
    for lcfg in cfg:
        cout, K, rep = lcfg["filters"], lcfg["kernel"], lcfg["repeat"]
        convs = []
        cin_loop = cin
        for _ in range(rep):
            key, sub = jax.random.split(key)
            w = _xavier_uniform(sub, (cout, cin_loop, K))
            sc, sh = _bn_affine(cout)
            convs.append((w, sc, sh))
            cin_loop = cout
        res = None
        if lcfg["residual"]:
            key, sub = jax.random.split(key)
            wr = _xavier_uniform(sub, (cout, cin, 1))
            scr, shr = _bn_affine(cout)
            res = (wr, scr, shr)
        params.append({"convs": convs, "res": res, "kernel": K})
        cin = cout
    return params


def conv_asr_encoder_forward(prepared_params, audio_signal, length=None, *,
                             t_tile=512, compute_dtype=jnp.float32,
                             interblock_dtype=None):
    """Mirrors ConvASREncoder.forward (eval mode) for the synthetic config."""
    B, _, T = audio_signal.shape
    lens = (jnp.full((B,), T, jnp.int32) if length is None
            else length.astype(jnp.int32))
    final_dtype = audio_signal.dtype
    x = audio_signal
    n = len(prepared_params)
    for i, prep in enumerate(prepared_params):
        last = i == n - 1
        out_dtype = final_dtype if last else (interblock_dtype or x.dtype)
        x = jasper_block_forward(x, lens, prep, t_tile=t_tile,
                                 compute_dtype=compute_dtype,
                                 out_dtype=out_dtype)
        for _ in range(prep["rep"]):
            lens = _update_lens(lens, prep["kernel"])
    if length is None:
        return x
    return x, lens


# ----------------------------------------------------------------------------
# Pure-JAX reference for verification
# ----------------------------------------------------------------------------
def _ref_masked_conv_bn_act(x, lens, w, scale, shift, apply_relu):
    B, Cin, T = x.shape
    K = w.shape[-1]
    pad = (K - 1) // 2
    mask = (jnp.arange(T)[None, None, :] < lens[:, None, None]).astype(x.dtype)
    xm = x * mask
    out = jax.lax.conv_general_dilated(
        xm, w, window_strides=(1,), padding=[(pad, pad)],
        dimension_numbers=("NCH", "OIH", "NCH"),
        precision=jax.lax.Precision.HIGHEST)
    out = out * scale[None, :, None] + shift[None, :, None]
    if apply_relu:
        out = jnp.maximum(out, 0.0)
    return out


def ref_forward(params, x, lens):
    for bp in params:
        x_in, lens_orig = x, lens
        convs = bp["convs"]
        has_res = bp["res"] is not None
        n = len(convs)
        for r, (w, sc, sh) in enumerate(convs):
            last = r == n - 1
            x = _ref_masked_conv_bn_act(x, lens, w, sc, sh,
                                        (not last) or (not has_res))
            lens = _update_lens(lens, bp["kernel"])
        if has_res:
            wr, scr, shr = bp["res"]
            res = _ref_masked_conv_bn_act(x_in, lens_orig, wr, scr, shr, False)
            x = jnp.maximum(x + res, 0.0)
    return x, lens


# ----------------------------------------------------------------------------
if __name__ == "__main__":
    key = jax.random.PRNGKey(0)
    # T multiple of 128; t_tile=128 -> nT=2 so the halo/tiling path is tested.
    B, FEAT_IN, T = 2, 16, 256

    key, kx = jax.random.split(key)
    audio_signal = jax.random.normal(kx, (B, FEAT_IN, T), jnp.float32)
    length = jnp.array([T, 170], dtype=jnp.int32)

    params = init_params(key, FEAT_IN, JASPER_CFG)
    ref_out, ref_lens = ref_forward(params, audio_signal, length)

    # f32 MXU operands.
    prep_f32 = [prepare_jasper_block(bp, compute_dtype=jnp.float32)
                for bp in params]
    out, out_lens = conv_asr_encoder_forward(prep_f32, audio_signal, length,
                                             t_tile=128,
                                             compute_dtype=jnp.float32)
    out = jax.block_until_ready(out)
    out_lens = jax.block_until_ready(out_lens)
    assert out.shape == (B, JASPER_CFG[-1]["filters"], T), out.shape
    assert jnp.array_equal(out_lens, ref_lens)
    max_err = float(jnp.max(jnp.abs(out - ref_out)))
    assert jnp.allclose(out, ref_out, atol=2e-2, rtol=2e-2), max_err

    # bf16 MXU operands + bf16 intermediates + bf16 inter-block activations
    # (v5e HBM-bandwidth lever); f32 accumulate, f32 epilogue, f32 final out.
    prep_bf16 = [prepare_jasper_block(bp, compute_dtype=jnp.bfloat16)
                 for bp in params]
    out_bf16, _ = conv_asr_encoder_forward(prep_bf16, audio_signal, length,
                                           t_tile=128,
                                           compute_dtype=jnp.bfloat16,
                                           interblock_dtype=jnp.bfloat16)
    out_bf16 = jax.block_until_ready(out_bf16)
    max_err_bf16 = float(jnp.max(jnp.abs(out_bf16 - ref_out)))
    assert jnp.allclose(out_bf16, ref_out, atol=0.25, rtol=0.1), max_err_bf16

    print("KERNEL_OK")
</pallas_src>

<mosaic_0001>
module attributes {stable_mosaic.version = 11 : i64} {
  func.func @_jasper_block_kernel(%arg0: i32, %arg1: i32, %arg2: memref<2xi32, #tpu.memory_space<smem>>, %arg3: memref<1x16x128xf32, #tpu.memory_space<vmem>>, %arg4: memref<1x16x128xf32, #tpu.memory_space<vmem>>, %arg5: memref<1x16x128xf32, #tpu.memory_space<vmem>>, %arg6: memref<32x48xf32, #tpu.memory_space<vmem>>, %arg7: memref<32x1xf32, #tpu.memory_space<vmem>>, %arg8: memref<1x32x128xf32, #tpu.memory_space<vmem>>, %arg9: memref<48x256xf32, #tpu.memory_space<vmem>>) attributes {dimension_semantics = [#tpu.dimension_semantics<parallel>, #tpu.dimension_semantics<parallel>], iteration_bounds = array<i64: 2, 2>, scalar_prefetch = 1 : i64, scratch_operands = 1 : i64, tpu.core_type = #tpu.core_type<tc>, window_params = [{transform_indices = @transform_0, window_bounds = array<i64: 1, 16, 128>}, {transform_indices = @transform_1, window_bounds = array<i64: 1, 16, 128>}, {transform_indices = @transform_2, window_bounds = array<i64: 1, 16, 128>}, {pipeline_mode = #tpu.pipeline_mode<synchronous>, transform_indices = @transform_3, window_bounds = array<i64: 32, 48>}, {pipeline_mode = #tpu.pipeline_mode<synchronous>, transform_indices = @transform_4, window_bounds = array<i64: 32, 1>}, {transform_indices = @transform_5, window_bounds = array<i64: 1, 32, 128>}]} {
    %0 = arith.index_cast %arg0 : i32 to index
    %1 = memref.load %arg2[%0] : memref<2xi32, #tpu.memory_space<smem>>
    %c128_i32 = arith.constant 128 : i32
    %2 = arith.muli %arg1, %c128_i32 : i32
    %c0 = arith.constant 0 : index
    %c0_0 = arith.constant 0 : index
    %c0_1 = arith.constant 0 : index
    %3 = vector.load %arg3[%c0, %c0_0, %c0_1] : memref<1x16x128xf32, #tpu.memory_space<vmem>>, vector<1x16x128xf32>
    %4 = vector.shape_cast %3 : vector<1x16x128xf32> to vector<16x128xf32>
    %c0_2 = arith.constant 0 : index
    %c0_3 = arith.constant 0 : index
    %c0_4 = arith.constant 0 : index
    %5 = vector.load %arg4[%c0_2, %c0_3, %c0_4] : memref<1x16x128xf32, #tpu.memory_space<vmem>>, vector<1x16x128xf32>
    %6 = vector.shape_cast %5 : vector<1x16x128xf32> to vector<16x128xf32>
    %c0_5 = arith.constant 0 : index
    %c0_6 = arith.constant 0 : index
    %c0_7 = arith.constant 0 : index
    %7 = vector.load %arg5[%c0_5, %c0_6, %c0_7] : memref<1x16x128xf32, #tpu.memory_space<vmem>>, vector<1x16x128xf32>
    %8 = vector.shape_cast %7 : vector<1x16x128xf32> to vector<16x128xf32>
    %9 = tpu.concatenate %4, %6, %8 in 1 : vector<16x128xf32>, vector<16x128xf32>, vector<16x128xf32> -> vector<16x384xf32>
    %10 = vector.extract_strided_slice %9 {offsets = [0, 127], sizes = [16, 130], strides = [1, 1]} : vector<16x384xf32> to vector<16x130xf32>
    %c1_i32 = arith.constant 1 : i32
    %11 = arith.subi %2, %c1_i32 : i32
    %12 = tpu.iota {dimensions = array<i32: 1>} : vector<1x130xi32>
    %13 = vector.broadcast %11 : i32 to vector<1x130xi32>
    %14 = arith.addi %13, %12 : vector<1x130xi32>
    %c0_i32 = arith.constant 0 : i32
    %15 = vector.broadcast %c0_i32 : i32 to vector<1x130xi32>
    %16 = arith.cmpi sge, %14, %15 : vector<1x130xi32>
    %17 = vector.broadcast %1 : i32 to vector<1x130xi32>
    %18 = arith.cmpi slt, %14, %17 : vector<1x130xi32>
    %19 = arith.andi %16, %18 : vector<1x130xi1>
    %c0_i32_8 = arith.constant 0 : i32
    %20 = arith.sitofp %c0_i32_8 : i32 to f32
    %21 = vector.shape_cast %19 : vector<1x130xi1> to vector<1x130xi1>
    %22 = vector.broadcast %21 : vector<1x130xi1> to vector<16x130xi1>
    %23 = vector.broadcast %20 : f32 to vector<16x130xf32>
    %24 = arith.select %22, %10, %23 : vector<16x130xi1>, vector<16x130xf32>
    %25 = vector.extract_strided_slice %24 {offsets = [0, 0], sizes = [16, 128], strides = [1, 1]} : vector<16x130xf32> to vector<16x128xf32>
    %c0_9 = arith.constant 0 : index
    %c0_10 = arith.constant 0 : index
    %26 = vector.load %arg9[%c0_9, %c0_10] : memref<48x256xf32, #tpu.memory_space<vmem>>, vector<16x128xf32>
    tpu.vector_store %arg9[%c0_9, %c0_10], %25 {strides = array<i32>} : memref<48x256xf32, #tpu.memory_space<vmem>>, vector<16x128xf32>,
    %27 = vector.extract_strided_slice %24 {offsets = [0, 1], sizes = [16, 128], strides = [1, 1]} : vector<16x130xf32> to vector<16x128xf32>
    %c16 = arith.constant 16 : index
    %c0_11 = arith.constant 0 : index
    %28 = vector.load %arg9[%c16, %c0_11] : memref<48x256xf32, #tpu.memory_space<vmem>>, vector<16x128xf32>
    tpu.vector_store %arg9[%c16, %c0_11], %27 {strides = array<i32>} : memref<48x256xf32, #tpu.memory_space<vmem>>, vector<16x128xf32>,
    %29 = vector.extract_strided_slice %24 {offsets = [0, 2], sizes = [16, 128], strides = [1, 1]} : vector<16x130xf32> to vector<16x128xf32>
    %c32 = arith.constant 32 : index
    %c0_12 = arith.constant 0 : index
    %30 = vector.load %arg9[%c32, %c0_12] : memref<48x256xf32, #tpu.memory_space<vmem>>, vector<16x128xf32>
    tpu.vector_store %arg9[%c32, %c0_12], %29 {strides = array<i32>} : memref<48x256xf32, #tpu.memory_space<vmem>>, vector<16x128xf32>,
    %c0_13 = arith.constant 0 : index
    %c0_14 = arith.constant 0 : index
    %31 = vector.load %arg6[%c0_13, %c0_14] : memref<32x48xf32, #tpu.memory_space<vmem>>, vector<32x48xf32>
    %c0_15 = arith.constant 0 : index
    %c0_16 = arith.constant 0 : index
    %32 = vector.load %arg9[%c0_15, %c0_16] : memref<48x256xf32, #tpu.memory_space<vmem>>, vector<48x128xf32>
    %cst = arith.constant dense<0.000000e+00> : vector<32x128xf32>
    %33 = tpu.matmul %31, %32, %cst {dimension_numbers = #tpu.dot_dimension_numbers<[1], [0], [0], [1], [0, 0, 1, 1], [], []>} : vector<32x48xf32>, vector<48x128xf32>, vector<32x128xf32> -> vector<32x128xf32>
    %c0_17 = arith.constant 0 : index
    %c0_18 = arith.constant 0 : index
    %34 = vector.load %arg7[%c0_17, %c0_18] : memref<32x1xf32, #tpu.memory_space<vmem>>, vector<32x1xf32>
    %35 = vector.broadcast %34 : vector<32x1xf32> to vector<32x128xf32>
    %36 = arith.addf %33, %35 : vector<32x128xf32>
    %cst_19 = arith.constant 0.000000e+00 : f32
    %37 = vector.broadcast %cst_19 : f32 to vector<32x128xf32>
    %38 = arith.maximumf %36, %37 : vector<32x128xf32>
    %c0_20 = arith.constant 0 : index
    %c0_21 = arith.constant 0 : index
    %c0_22 = arith.constant 0 : index
    %39 = vector.load %arg8[%c0_20, %c0_21, %c0_22] : memref<1x32x128xf32, #tpu.memory_space<vmem>>, vector<1x32x128xf32>
    %40 = vector.shape_cast %39 : vector<1x32x128xf32> to vector<32x128xf32>
    %41 = vector.shape_cast %38 : vector<32x128xf32> to vector<1x32x128xf32>
    tpu.vector_store %arg8[%c0_20, %c0_21, %c0_22], %41 {strides = array<i32>} : memref<1x32x128xf32, #tpu.memory_space<vmem>>, vector<1x32x128xf32>,
    return
  }
  func.func @transform_0(%arg0: i32, %arg1: i32, %arg2: memref<2xi32, #tpu.memory_space<smem>>) -> (i32, i32, i32) {
    %c1_i32 = arith.constant 1 : i32
    %0 = arith.muli %arg1, %c1_i32 : i32
    %c1_i32_0 = arith.constant 1 : i32
    %1 = arith.subi %0, %c1_i32_0 : i32
    %c0_i32 = arith.constant 0 : i32
    %2 = arith.maxsi %1, %c0_i32 : i32
    %c0_i32_1 = arith.constant 0 : i32
    %c0_i32_2 = arith.constant 0 : i32
    return %arg0, %c0_i32_1, %2 : i32, i32, i32
  }
  func.func @transform_1(%arg0: i32, %arg1: i32, %arg2: memref<2xi32, #tpu.memory_space<smem>>) -> (i32, i32, i32) {
    %c0_i32 = arith.constant 0 : i32
    %c0_i32_0 = arith.constant 0 : i32
    return %arg0, %c0_i32, %arg1 : i32, i32, i32
  }
  func.func @transform_2(%arg0: i32, %arg1: i32, %arg2: memref<2xi32, #tpu.memory_space<smem>>) -> (i32, i32, i32) {
    %c1_i32 = arith.constant 1 : i32
    %0 = arith.addi %arg1, %c1_i32 : i32
    %c1_i32_0 = arith.constant 1 : i32
    %1 = arith.muli %0, %c1_i32_0 : i32
    %c1_i32_1 = arith.constant 1 : i32
    %2 = arith.minsi %1, %c1_i32_1 : i32
    %c0_i32 = arith.constant 0 : i32
    %c0_i32_2 = arith.constant 0 : i32
    return %arg0, %c0_i32, %2 : i32, i32, i32
  }
  func.func @transform_3(%arg0: i32, %arg1: i32, %arg2: memref<2xi32, #tpu.memory_space<smem>>) -> (i32, i32) {
    %c0_i32 = arith.constant 0 : i32
    %c0_i32_0 = arith.constant 0 : i32
    %c0_i32_1 = arith.constant 0 : i32
    return %c0_i32, %c0_i32_0 : i32, i32
  }
  func.func @transform_4(%arg0: i32, %arg1: i32, %arg2: memref<2xi32, #tpu.memory_space<smem>>) -> (i32, i32) {
    %c0_i32 = arith.constant 0 : i32
    %c0_i32_0 = arith.constant 0 : i32
    %c0_i32_1 = arith.constant 0 : i32
    return %c0_i32, %c0_i32_0 : i32, i32
  }
  func.func @transform_5(%arg0: i32, %arg1: i32, %arg2: memref<2xi32, #tpu.memory_space<smem>>) -> (i32, i32, i32) {
    %c0_i32 = arith.constant 0 : i32
    %c0_i32_0 = arith.constant 0 : i32
    return %arg0, %c0_i32, %arg1 : i32, i32, i32
  }
}

</mosaic_0001>

<llo_original>
// kernel: tpu_custom_call.1
$region0: #{tpu_custom_call.1}
  #allocation0 [shape = 'u32[]', space=smem, size = 0x4, offset = 0x4, fixed_abs, tag = 'smem constant byte address 0x4 - core index']
  #allocation1 [shape = 'u32[144,128]{1,0:T(1,128)}', space=vmem, size = 0x12000, scoped, tag = 'internal scratch']
  #allocation2 [shape = 'f32[48,256]{1,0:T(8,128)}', space=vmem, size = 0xc000, scoped, tag = 'scratch operand']
  #allocation3 [shape = 's32[1]{0}', space=sflag, size = 0x4, scoped, tag = 'scoped memory for tpu_custom_call.1']
  #allocation4 [shape = 'u8[512]{0}', space=smem, size = 0x200, scoped, tag = 'prefetched SMEM operand 0']
  %s0 = inlined_call_operand.vmem [shape: s32[2], index: 0, kind: input, shape index: {}]
  %s1 = inlined_call_operand.hbm [shape: f32[2,16,256], index: 1, kind: input, shape index: {}]
  %s2 = inlined_call_operand.hbm [shape: f32[2,16,256], index: 2, kind: input, shape index: {}]
  %s3 = inlined_call_operand.hbm [shape: f32[2,16,256], index: 3, kind: input, shape index: {}]
  %s4 = inlined_call_operand.vmem [shape: f32[32,48], index: 4, kind: input, shape index: {}]
  %s5 = inlined_call_operand.vmem [shape: f32[32,1], index: 5, kind: input, shape index: {}]
  %s6 = inlined_call_operand.hbm [shape: f32[2,32,256], index: 6, kind: output, shape index: {}]
  %s7 = sld [smem:[#allocation0]]
  $region65: #{tpu_custom_call.1} parent=0
    _
  %s9 = ssub.s32 1, %s7
  %s10 = scalar_select 0, %s9, %s7
  %s11 = sshll.u32 %s0, 4
  %s12 = int_to_ptr.vmem [resolvable:$true] %s11
  %14 = dma.vmem_to_smem %s12, 16, [#allocation4], [#allocation3]
  %15 = dma.done [#allocation3], 16
  %16 = sfence
  $region1: #{tpu_custom_call.1} parent=0
    #allocation5 [shape = 'u8[16384]{0}', space=vmem, size = 0x4000, scoped, tag = 'input window, operand 1']
    #allocation6 [shape = 's32[2]{0}', space=sflag, size = 0x8, scoped, tag = 'scoped memory for tpu_custom_call.1']
    #allocation7 [shape = 's32[2]{0}', space=sflag, size = 0x8, scoped, tag = 'scoped memory for tpu_custom_call.1']
    #allocation8 [shape = 'u8[16384]{0}', space=vmem, size = 0x4000, scoped, tag = 'input window, operand 2']
    #allocation9 [shape = 's32[2]{0}', space=sflag, size = 0x8, scoped, tag = 'scoped memory for tpu_custom_call.1']
    #allocation10 [shape = 'u8[16384]{0}', space=vmem, size = 0x4000, scoped, tag = 'input window, operand 3']
    #allocation11 [shape = 'u8[32768]{0}', space=vmem, size = 0x8000, scoped, tag = 'output window, operand 0']
    %17 = vsyncpa [#allocation6], 0
    %s18 = scalar_lea.sflag [#allocation6], 1
    %19 = vsyncpa %s18, 0
    %20 = vsyncpa [#allocation9], 0
    %s21 = scalar_lea.sflag [#allocation9], 1
    %22 = vsyncpa %s21, 0
    %23 = vsyncpa [#allocation7], 0
    %s24 = scalar_lea.sflag [#allocation7], 1
    %25 = vsyncpa %s24, 0
    loop: start=0, step=1, limit=6
    $region2: #{tpu_custom_call.1} parent=1 // loop_pre_header
      _
    $region3: #{tpu_custom_call.1} parent=1 // loop_header
      %s27 = sphi 0, %s31
      %p28 = scmp.ge.s32.totalorder %s27, 6
      %s34 = sphi 0, %s46
      %s35 = sphi 0, %s42
      %s36 = sphi 0, %s34
      %s37 = sphi 0, %s35
      %s38 = sphi 0, %s36
      %s39 = sphi 0, %s37
      %s57 = sphi 0, %s59
      %s60 = sphi 0, %s57
      %s61 = sphi 0, %s60
      %s77 = sphi 0, %s61
      %s85 = sphi 0, %s87
      %s88 = sphi 0, %s85
      %s89 = sphi 0, %s88
      %s105 = sphi 0, %s89
      %s119 = sphi 0, %s121
      %s122 = sphi 0, %s119
      %s123 = sphi 0, %s122
      %s139 = sphi 0, %s123
      %s143 = sphi 0, %s143
      %s145 = sphi 0, %s143
      %s146 = sphi 0, %s145
      %s160 = sphi 0, %s146
      %s164 = sphi 0, %s164
      %s166 = sphi 0, %s164
      %s167 = sphi 0, %s166
      %s181 = sphi 0, %s167
      %s189 = sphi 0, %s191
      %s192 = sphi 0, %s189
      %s193 = sphi 0, %s192
      %s209 = sphi 0, %s193
    $region4: #{tpu_custom_call.1} parent=1 // loop_header_branch
      %30 = sbr.rel (%p28) target = $region8
    $region5: #{tpu_custom_call.1} parent=1 // loop_body
      %s32 = ssub.s32 %s27, 1
      %s33 = ssub.s32 %s27, 2
      %s40 = sadd.s32 1, %s35
      %p41 = scmp.ge.s32.totalorder %s40, 2
      %s42 = scalar_select %p41, 0, %s40
      %s43 = sadd.s32 1, %s34
      %s44 = scalar_select %p41, %s43, %s34
      %p45 = scmp.ge.s32.totalorder %s44, 2
      %s46 = scalar_select %p45, 0, %s44
      %s47 = ssub.s32 %s35, 1
      %p48 = scmp.gt.s32.totalorder %s47, 0
      %s49 = scalar_select %p48, %s47, 0
      %s50 = ssub.s32 %s42, 1
      %p51 = scmp.gt.s32.totalorder %s50, 0
      %s52 = scalar_select %p51, %s50, 0
      %s53 = ssub.s32 %s34, %s46
      %s54 = ssub.s32 %s49, %s52
      %s55 = sor.u32 %s53, %s54
      %p56 = scmp.eq.s32.totalorder %s55, 0
      %s58 = sadd.s32 %s57, 1
      %s59 = scalar_select %p56, %s57, %s58
      %p62 = pneg %p56
      %p63 = scmp.eq.s32.totalorder %s27, 3
      %p64 = por %p62, %p63
      %p65 = scmp.ne.s32.totalorder %s57, %s60
      %p66 = scmp.eq.s32.totalorder %s27, 0
      %p67 = por %p65, %p66
      %p68 = scmp.ne.s32.totalorder %s57, %s60
      %p69 = scmp.eq.s32.totalorder %s32, 3
      %p70 = por %p68, %p69
      %p71 = scmp.ne.s32.totalorder %s60, %s61
      %p72 = scmp.eq.s32.totalorder %s32, 0
      %p73 = por %p71, %p72
      %p74 = scmp.ne.s32.totalorder %s60, %s61
      %p75 = scmp.eq.s32.totalorder %s33, 3
      %p76 = por %p74, %p75
      %p78 = scmp.ne.s32.totalorder %s61, %s77
      %p79 = scmp.eq.s32.totalorder %s33, 0
      %p80 = por %p78, %p79
      %s81 = ssub.s32 %s34, %s46
      %s82 = ssub.s32 %s35, %s42
      %s83 = sor.u32 %s81, %s82
      %p84 = scmp.eq.s32.totalorder %s83, 0
      %s86 = sadd.s32 %s85, 1
      %s87 = scalar_select %p84, %s85, %s86
      %p90 = pneg %p84
      %p91 = scmp.eq.s32.totalorder %s27, 3
      %p92 = por %p90, %p91
      %p93 = scmp.ne.s32.totalorder %s85, %s88
      %p94 = scmp.eq.s32.totalorder %s27, 0
      %p95 = por %p93, %p94
      %p96 = scmp.ne.s32.totalorder %s85, %s88
      %p97 = scmp.eq.s32.totalorder %s32, 3
      %p98 = por %p96, %p97
      %p99 = scmp.ne.s32.totalorder %s88, %s89
      %p100 = scmp.eq.s32.totalorder %s32, 0
      %p101 = por %p99, %p100
      %p102 = scmp.ne.s32.totalorder %s88, %s89
      %p103 = scmp.eq.s32.totalorder %s33, 3
      %p104 = por %p102, %p103
      %p106 = scmp.ne.s32.totalorder %s89, %s105
      %p107 = scmp.eq.s32.totalorder %s33, 0
      %p108 = por %p106, %p107
      %s109 = sadd.s32 %s35, 1
      %p110 = scmp.lt.s32.totalorder %s109, 1
      %s111 = scalar_select %p110, %s109, 1
      %s112 = sadd.s32 %s42, 1
      %p113 = scmp.lt.s32.totalorder %s112, 1
      %s114 = scalar_select %p113, %s112, 1
      %s115 = ssub.s32 %s34, %s46
      %s116 = ssub.s32 %s111, %s114
      %s117 = sor.u32 %s115, %s116
      %p118 = scmp.eq.s32.totalorder %s117, 0
      %s120 = sadd.s32 %s119, 1
      %s121 = scalar_select %p118, %s119, %s120
      %p124 = pneg %p118
      %p125 = scmp.eq.s32.totalorder %s27, 3
      %p126 = por %p124, %p125
      %p127 = scmp.ne.s32.totalorder %s119, %s122
      %p128 = scmp.eq.s32.totalorder %s27, 0
      %p129 = por %p127, %p128
      %p130 = scmp.ne.s32.totalorder %s119, %s122
      %p131 = scmp.eq.s32.totalorder %s32, 3
      %p132 = por %p130, %p131
      %p133 = scmp.ne.s32.totalorder %s122, %s123
      %p134 = scmp.eq.s32.totalorder %s32, 0
      %p135 = por %p133, %p134
      %p136 = scmp.ne.s32.totalorder %s122, %s123
      %p137 = scmp.eq.s32.totalorder %s33, 3
      %p138 = por %p136, %p137
      %p140 = scmp.ne.s32.totalorder %s123, %s139
      %p141 = scmp.eq.s32.totalorder %s33, 0
      %p142 = por %p140, %p141
      %s144 = sadd.s32 %s143, 1
      %p147 = scmp.eq.s32.totalorder %s27, 3
      %p148 = scmp.ne.s32.totalorder %s143, %s145
      %p149 = scmp.eq.s32.totalorder %s27, 0
      %p150 = por %p148, %p149
      %p151 = scmp.ne.s32.totalorder %s143, %s145
      %p152 = scmp.eq.s32.totalorder %s32, 3
      %p153 = por %p151, %p152
      %p154 = scmp.ne.s32.totalorder %s145, %s146
      %p155 = scmp.eq.s32.totalorder %s32, 0
      %p156 = por %p154, %p155
      %p157 = scmp.ne.s32.totalorder %s145, %s146
      %p158 = scmp.eq.s32.totalorder %s33, 3
      %p159 = por %p157, %p158
      %p161 = scmp.ne.s32.totalorder %s146, %s160
      %p162 = scmp.eq.s32.totalorder %s33, 0
      %p163 = por %p161, %p162
      %s165 = sadd.s32 %s164, 1
      %p168 = scmp.eq.s32.totalorder %s27, 3
      %p169 = scmp.ne.s32.totalorder %s164, %s166
      %p170 = scmp.eq.s32.totalorder %s27, 0
      %p171 = por %p169, %p170
      %p172 = scmp.ne.s32.totalorder %s164, %s166
      %p173 = scmp.eq.s32.totalorder %s32, 3
      %p174 = por %p172, %p173
      %p175 = scmp.ne.s32.totalorder %s166, %s167
      %p176 = scmp.eq.s32.totalorder %s32, 0
      %p177 = por %p175, %p176
      %p178 = scmp.ne.s32.totalorder %s166, %s167
      %p179 = scmp.eq.s32.totalorder %s33, 3
      %p180 = por %p178, %p179
      %p182 = scmp.ne.s32.totalorder %s167, %s181
      %p183 = scmp.eq.s32.totalorder %s33, 0
      %p184 = por %p182, %p183
      %s185 = ssub.s32 %s34, %s46
      %s186 = ssub.s32 %s35, %s42
      %s187 = sor.u32 %s185, %s186
      %p188 = scmp.eq.s32.totalorder %s187, 0
      %s190 = sadd.s32 %s189, 1
      %s191 = scalar_select %p188, %s189, %s190
      %p194 = pneg %p188
      %p195 = scmp.eq.s32.totalorder %s27, 3
      %p196 = por %p194, %p195
      %p197 = scmp.ne.s32.totalorder %s189, %s192
      %p198 = scmp.eq.s32.totalorder %s27, 0
      %p199 = por %p197, %p198
      %p200 = scmp.ne.s32.totalorder %s189, %s192
      %p201 = scmp.eq.s32.totalorder %s32, 3
      %p202 = por %p200, %p201
      %p203 = scmp.ne.s32.totalorder %s192, %s193
      %p204 = scmp.eq.s32.totalorder %s32, 0
      %p205 = por %p203, %p204
      %p206 = scmp.ne.s32.totalorder %s192, %s193
      %p207 = scmp.eq.s32.totalorder %s33, 3
      %p208 = por %p206, %p207
      %p210 = scmp.ne.s32.totalorder %s193, %s209
      %p211 = scmp.eq.s32.totalorder %s33, 0
      %p212 = por %p210, %p211
      %p213 = scmp.le.s32.totalorder 1, %s27
      %p214 = scmp.lt.s32.totalorder %s27, 5
      %p215 = pnand %p213, %p214
      %p216 = pneg %p215
      // Predicated region
      $region9: #{tpu_custom_call.1} parent=5 // pred_check
        _
      $region10: #{tpu_custom_call.1} parent=5 // pred_check_branch
        %218 = sbr.rel (%p215) target = $region12
      $region11: #{tpu_custom_call.1} parent=5 // pred_region
        %s219 = ssub.s32 %s27, 1
        // Predicated region
        $region13: #{tpu_custom_call.1} parent=11 // pred_check
          %p220 = pneg %p156
        $region14: #{tpu_custom_call.1} parent=11 // pred_check_branch
          %222 = sbr.rel (%p220) target = $region16
        $region15: #{tpu_custom_call.1} parent=11 // pred_region
          _
        $region16: #{tpu_custom_call.1} parent=11 // pred_fallthru
          _
        // Predicated region
        $region17: #{tpu_custom_call.1} parent=11 // pred_check
          %p223 = pneg %p177
        $region18: #{tpu_custom_call.1} parent=11 // pred_check_branch
          %225 = sbr.rel (%p223) target = $region20
        $region19: #{tpu_custom_call.1} parent=11 // pred_region
          _
        $region20: #{tpu_custom_call.1} parent=11 // pred_fallthru
          _
      $region12: #{tpu_custom_call.1} parent=5 // pred_fallthru
        _
      %p226 = scmp.lt.s32.totalorder %s27, 4
      // Predicated region
      $region21: #{tpu_custom_call.1} parent=5 // pred_check
        %p227 = pneg %p226
      $region22: #{tpu_custom_call.1} parent=5 // pred_check_branch
        %229 = sbr.rel (%p227) target = $region24
      $region23: #{tpu_custom_call.1} parent=5 // pred_region
        // Predicated region
        $region25: #{tpu_custom_call.1} parent=23 // pred_check
          %p230 = pneg %p67
        $region26: #{tpu_custom_call.1} parent=23 // pred_check_branch
          %232 = sbr.rel (%p230) target = $region28
        $region27: #{tpu_custom_call.1} parent=23 // pred_region
          %s233 = sand.u32 %s57, 1
          %s234 = scalar_lea.sflag [#allocation6], %s233
          %s235 = sand.u32 %s57, 1
          %s236 = smul.addr %s235, 16
          %s237 = scalar_lea.vmem [#allocation5], %s236
          %s238 = ssub.s32 %s35, 1
          %p239 = scmp.gt.s32.totalorder %s238, 0
          %s240 = scalar_select %p239, %s238, 0
          %s242 = ssub.s32 256, 256
          %243 = vsyncadd %s234, %s242
          %s244 = smul.addr %s34, 4
          %s245 = sadd.s32 %s240, %s244
          %s246 = smul.addr %s245, 128
          %s247 = scalar_lea.hbm %s1, %s246
          %s248 = sshll.u32 %s237, 4
          %s249 = int_to_ptr.vmem [resolvable:$true] %s248
          %254 = dma.hbm_to_vmem [thread:$0]  %s247, 256, %s249, %s234, 256, 128, 8
        $region28: #{tpu_custom_call.1} parent=23 // pred_fallthru
          _
        // Predicated region
        $region29: #{tpu_custom_call.1} parent=23 // pred_check
          %p255 = pneg %p95
        $region30: #{tpu_custom_call.1} parent=23 // pred_check_branch
          %257 = sbr.rel (%p255) target = $region32
        $region31: #{tpu_custom_call.1} parent=23 // pred_region
          %s258 = sand.u32 %s27, 1
          %s259 = scalar_lea.sflag [#allocation9], %s258
          %s260 = sand.u32 %s85, 1
          %s261 = smul.addr %s260, 16
          %s262 = scalar_lea.vmem [#allocation8], %s261
          %s264 = ssub.s32 256, 256
          %265 = vsyncadd %s259, %s264
          %s266 = smul.addr %s34, 4
          %s267 = sadd.s32 %s35, %s266
          %s268 = smul.addr %s267, 128
          %s269 = scalar_lea.hbm %s2, %s268
          %s270 = sshll.u32 %s262, 4
          %s271 = int_to_ptr.vmem [resolvable:$true] %s270
          %276 = dma.hbm_to_vmem [thread:$0]  %s269, 256, %s271, %s259, 256, 128, 8
        $region32: #{tpu_custom_call.1} parent=23 // pred_fallthru
          _
        // Predicated region
        $region33: #{tpu_custom_call.1} parent=23 // pred_check
          %p277 = pneg %p129
        $region34: #{tpu_custom_call.1} parent=23 // pred_check_branch
          %279 = sbr.rel (%p277) target = $region36
        $region35: #{tpu_custom_call.1} parent=23 // pred_region
          %s280 = sand.u32 %s27, 1
          %s281 = scalar_lea.sflag [#allocation9], %s280
          %s282 = sand.u32 %s119, 1
          %s283 = smul.addr %s282, 16
          %s284 = scalar_lea.vmem [#allocation10], %s283
          %s285 = sadd.s32 %s35, 1
          %p286 = scmp.lt.s32.totalorder %s285, 1
          %s287 = scalar_select %p286, %s285, 1
          %s289 = ssub.s32 256, 256
          %290 = vsyncadd %s281, %s289
          %s291 = smul.addr %s34, 4
          %s292 = sadd.s32 %s287, %s291
          %s293 = smul.addr %s292, 128
          %s294 = scalar_lea.hbm %s3, %s293
          %s295 = sshll.u32 %s284, 4
          %s296 = int_to_ptr.vmem [resolvable:$true] %s295
          %301 = dma.hbm_to_vmem [thread:$0]  %s294, 256, %s296, %s281, 256, 128, 8
        $region36: #{tpu_custom_call.1} parent=23 // pred_fallthru
          _
      $region24: #{tpu_custom_call.1} parent=5 // pred_fallthru
        _
      %p302 = scmp.le.s32.totalorder 1, %s27
      %p303 = scmp.lt.s32.totalorder %s27, 5
      %p304 = pnand %p302, %p303
      %p305 = pneg %p304
      // Predicated region
      $region37: #{tpu_custom_call.1} parent=5 // pred_check
        _
      $region38: #{tpu_custom_call.1} parent=5 // pred_check_branch
        %307 = sbr.rel (%p304) target = $region40
      $region39: #{tpu_custom_call.1} parent=5 // pred_region
        %s308 = ssub.s32 %s27, 1
        %s309 = sand.u32 %s60, 1
        %s310 = scalar_lea.sflag [#allocation6], %s309
        %s311 = sand.u32 %s60, 1
        %s312 = smul.addr %s311, 16
        %s313 = scalar_lea.vmem [#allocation5], %s312
        // Predicated region
        $region41: #{tpu_custom_call.1} parent=39 // pred_check
          %p314 = pneg %p73
        $region42: #{tpu_custom_call.1} parent=39 // pred_check_branch
          %316 = sbr.rel (%p314) target = $region44
        $region43: #{tpu_custom_call.1} parent=39 // pred_region
          %317 = dma.done %s310, 256
        $region44: #{tpu_custom_call.1} parent=39 // pred_fallthru
          _
        %s318 = sand.u32 %s32, 1
        %s319 = scalar_lea.sflag [#allocation9], %s318
        %s320 = sand.u32 %s88, 1
        %s321 = smul.addr %s320, 16
        %s322 = scalar_lea.vmem [#allocation8], %s321
        // Predicated region
        $region45: #{tpu_custom_call.1} parent=39 // pred_check
          %p323 = pneg %p101
        $region46: #{tpu_custom_call.1} parent=39 // pred_check_branch
          %325 = sbr.rel (%p323) target = $region48
        $region47: #{tpu_custom_call.1} parent=39 // pred_region
          %326 = dma.done %s319, 256
        $region48: #{tpu_custom_call.1} parent=39 // pred_fallthru
          _
        %s327 = sand.u32 %s32, 1
        %s328 = scalar_lea.sflag [#allocation9], %s327
        %s329 = sand.u32 %s122, 1
        %s330 = smul.addr %s329, 16
        %s331 = scalar_lea.vmem [#allocation10], %s330
        // Predicated region
        $region49: #{tpu_custom_call.1} parent=39 // pred_check
          %p332 = pneg %p135
        $region50: #{tpu_custom_call.1} parent=39 // pred_check_branch
          %334 = sbr.rel (%p332) target = $region52
        $region51: #{tpu_custom_call.1} parent=39 // pred_region
          %335 = dma.done %s328, 256
        $region52: #{tpu_custom_call.1} parent=39 // pred_fallthru
          _
        %s336 = sand.u32 %s60, 1
        %s337 = scalar_lea.sflag [#allocation6], %s336
        %s338 = sand.u32 %s60, 1
        %s339 = smul.addr %s338, 16
        %s340 = scalar_lea.vmem [#allocation5], %s339
        %p341 = pneg %p73
        %p342 = pneg %p70
        %s343 = sand.u32 %s32, 1
        %s344 = scalar_lea.sflag [#allocation9], %s343
        %s345 = sand.u32 %s88, 1
        %s346 = smul.addr %s345, 16
        %s347 = scalar_lea.vmem [#allocation8], %s346
        %p348 = pneg %p101
        %p349 = pneg %p98
        %s350 = sand.u32 %s32, 1
        %s351 = scalar_lea.sflag [#allocation9], %s350
        %s352 = sand.u32 %s122, 1
        %s353 = smul.addr %s352, 16
        %s354 = scalar_lea.vmem [#allocation10], %s353
        %p355 = pneg %p135
        %p356 = pneg %p132
        %p357 = pneg %p156
        %p358 = pneg %p153
        %p359 = pneg %p177
        %p360 = pneg %p174
        %p361 = pneg %p205
        %p362 = pneg %p202
        %s363 = sand.u32 %s192, 1
        %s364 = scalar_lea.sflag [#allocation7], %s363
        %s365 = sand.u32 %s192, 1
        %s366 = smul.addr %s365, 32
        %s367 = scalar_lea.vmem [#allocation11], %s366
        %s368 = ssub.s32 %s37, 1
        %p369 = scmp.gt.s32.totalorder %s368, 0
        %s370 = scalar_select %p369, %s368, 0
        %s371 = sadd.s32 %s37, 1
        %p372 = scmp.lt.s32.totalorder %s371, 1
        %s373 = scalar_select %p372, %s371, 1
        %s374 = sld [smem:[#allocation4 + %s36]]
        %s375 = smul.u32 %s37, 128
        %v376 = vld [vmem:[%s313] sm:$0xff]
        %v377 = vld [vmem:[%s313 + $0x8] sm:$0xff]
        %v378 = vld [vmem:[%s322] sm:$0xff]
        %v379 = vld [vmem:[%s322 + $0x8] sm:$0xff]
        %v380 = vld [vmem:[%s331] sm:$0xff]
        %v381 = vld [vmem:[%s331 + $0x8] sm:$0xff]
        %s382 = ssub.s32 %s375, 1
        %v383 = vlaneseq
        %v384 = vand.u32 %v383, 127
        %v385 = vadd.s32 %v384, 128
        %v386 = vstv %s382
        %v387 = vadd.s32 %v386, %v384
        %v388 = vadd.s32 %v386, %v385
        %vm389 = vcmp.ge.s32.totalorder %v387, 0
        %vm390 = vcmp.ge.s32.totalorder %v388, 0
        %v391 = vstv %s374
        %vm392 = vcmp.lt.s32.totalorder %v387, %v391
        %vm393 = vcmp.lt.s32.totalorder %v388, %v391
        %vm394 = vmand %vm389, %vm392
        %vm395 = vmand %vm390, %vm393
        %v396 = vsel %vm394, 1, 0
        %v397 = vsel %vm395, 1, 0
        %vm398 = vcmp.eq.s32.totalorder %v396, 1
        %vm399 = vcmp.eq.s32.totalorder %v397, 1
        %406 = vrot.lane.b32.xlu0 %v376, 1
        %v407 = vpop.permute.xlu0 %406
        %408 = vrot.lane.b32.xlu0 %v378, 1
        %v409 = vpop.permute.xlu0 %408
        %410 = vrot.lane.b32.xlu0 %v380, 1
        %v411 = vpop.permute.xlu0 %410
        %412 = vrot.lane.b32.xlu0 %v377, 1
        %v413 = vpop.permute.xlu0 %412
        %414 = vrot.lane.b32.xlu0 %v379, 1
        %v415 = vpop.permute.xlu0 %414
        %416 = vrot.lane.b32.xlu0 %v381, 1
        %v417 = vpop.permute.xlu0 %416
        %vm418 = vcmask 7168
        %v419 = vsel %vm418, %v407, %v409
        %v420 = vsel %vm418, %v409, %v411
        %v421 = vsel %vm418, %v413, %v415
        %v422 = vsel %vm418, %v415, %v417
        %v427 = vsel %vm398, %v419, 0.0
        %v428 = vsel %vm399, %v420, 0.0
        %v429 = vsel %vm398, %v421, 0.0
        %v430 = vsel %vm399, %v422, 0.0
        %431 = vst [vmem:[#allocation2] sm:$0xff] %v427
        %432 = vst [vmem:[#allocation2 + $0x10] sm:$0xff] %v429
        %437 = vrot.lane.b32.xlu0 %v427, 127
        %v438 = vpop.permute.xlu0 %437
        %439 = vrot.lane.b32.xlu0 %v428, 127
        %v440 = vpop.permute.xlu0 %439
        %441 = vrot.lane.b32.xlu0 %v429, 127
        %v442 = vpop.permute.xlu0 %441
        %443 = vrot.lane.b32.xlu0 %v430, 127
        %v444 = vpop.permute.xlu0 %443
        %vm445 = vcmask 1039360
        %v446 = vsel %vm445, %v438, %v440
        %v447 = vsel %vm445, %v442, %v444
        %450 = vst [vmem:[#allocation2 + $0x20] sm:$0xff] %v446
        %451 = vst [vmem:[#allocation2 + $0x30] sm:$0xff] %v447
        %452 = vrot.lane.b32.xlu0 %v427, 126
        %v453 = vpop.permute.xlu0 %452
        %454 = vrot.lane.b32.xlu0 %v428, 126
        %v455 = vpop.permute.xlu0 %454
        %456 = vrot.lane.b32.xlu0 %v429, 126
        %v457 = vpop.permute.xlu0 %456
        %458 = vrot.lane.b32.xlu0 %v430, 126
        %v459 = vpop.permute.xlu0 %458
        %vm460 = vcmask 1031168
        %v461 = vsel %vm460, %v453, %v455
        %v462 = vsel %vm460, %v457, %v459
        %465 = vst [vmem:[#allocation2 + $0x40] sm:$0xff] %v461
        %466 = vst [vmem:[#allocation2 + $0x50] sm:$0xff] %v462
        %v467 = vld [vmem:[%s4] sm:$0xff]
        %v468 = vld [vmem:[%s4 + $0x8] sm:$0xff]
        %v469 = vld [vmem:[%s4 + $0x10] sm:$0xff]
        %v470 = vld [vmem:[%s4 + $0x18] sm:$0xff]
        %v471 = vld [vmem:[#allocation2] sm:$0xff]
        %v472 = vld [vmem:[#allocation2 + $0x10] sm:$0xff]
        %v473 = vld [vmem:[#allocation2 + $0x20] sm:$0xff]
        %v474 = vld [vmem:[#allocation2 + $0x30] sm:$0xff]
        %v475 = vld [vmem:[#allocation2 + $0x40] sm:$0xff]
        %v476 = vld [vmem:[#allocation2 + $0x50] sm:$0xff]
        %v477 = vld [vmem:[%s5] sm:$0xff]
        %v478 = vld [vmem:[%s5 + $0x8] sm:$0xff]
        %v479 = vld [vmem:[%s5 + $0x10] sm:$0xff]
        %v480 = vld [vmem:[%s5 + $0x18] sm:$0xff]
        %482 = vset.pattern.permute.xlu0 0
        %483 = vperm.xlu0 %482, %v477
        %v484 = vpop.permute.xlu0 %483
        %487 = vset.pattern.permute.xlu0 0
        %488 = vperm.xlu0 %487, %v478
        %v489 = vpop.permute.xlu0 %488
        %492 = vset.pattern.permute.xlu0 0
        %493 = vperm.xlu0 %492, %v479
        %v494 = vpop.permute.xlu0 %493
        %497 = vset.pattern.permute.xlu0 0
        %498 = vperm.xlu0 %497, %v480
        %v499 = vpop.permute.xlu0 %498
        %vm501 = vcmask 392192
        %v503 = vsel %vm501, %v467, 0
        %v506 = vsel %vm501, %v468, 0
        %v509 = vsel %vm501, %v469, 0
        %v512 = vsel %vm501, %v470, 0
        %514 = vmatprep.subr.mxu0 0.0
        %515 = vmatpush1.msra.mxu0 0.0
        %516 = vmatprep.subr.mxu0 0.0
        %517 = vmatpush1.msra.mxu0 0.0
        %518 = vmatprep.subr.mxu0 0.0
        %519 = vmatpush1.msra.mxu0 0.0
        %520 = vmatprep.subr.mxu0 0.0
        %521 = vmatpush1.msra.mxu0 0.0
        %522 = vmatprep.subr.mxu0 0.0
        %523 = vmatpush1.msra.mxu0 0.0
        %524 = vmatprep.subr.mxu0 0.0
        %525 = vmatpush1.msra.mxu0 0.0
        %526 = vmatprep.subr.mxu0 0.0
        %527 = vmatpush1.msra.mxu0 0.0
        %528 = vmatprep.subr.mxu0 0.0
        %529 = vmatpush1.msra.mxu0 0.0
        %530 = vmatprep.subr.mxu0 0.0
        %531 = vmatpush1.msra.mxu0 0.0
        %532 = vmatprep.subr.mxu0 0.0
        %533 = vmatpush1.msra.mxu0 0.0
        %534 = vmatprep.subr.mxu0 0.0
        %535 = vmatpush1.msra.mxu0 %v476
        %536 = vmatprep.subr.mxu0 0.0
        %537 = vmatpush1.msra.mxu0 %v475
        %538 = vmatprep.subr.mxu0 0.0
        %539 = vmatpush1.msra.mxu0 %v474
        %540 = vmatprep.subr.mxu0 0.0
        %541 = vmatpush1.msra.mxu0 %v473
        %542 = vmatprep.subr.mxu0 0.0
        %543 = vmatpush1.msra.mxu0 %v472
        %544 = vmatprep.subr.mxu0 0.0
        %545 = vmatpush1.msra.mxu0 %v471
        %546 = vmatprep.subr.mxu0 0.0
        %547 = vmatpush2.msra.mxu0 0.0
        %548 = vmatprep.subr.mxu0 0.0
        %549 = vmatpush2.msra.mxu0 0.0
        %550 = vmatprep.subr.mxu0 0.0
        %551 = vmatpush2.msra.mxu0 0.0
        %552 = vmatprep.subr.mxu0 0.0
        %553 = vmatpush2.msra.mxu0 0.0
        %554 = vmatprep.subr.mxu0 0.0
        %555 = vmatpush2.msra.mxu0 0.0
        %556 = vmatprep.subr.mxu0 0.0
        %557 = vmatpush2.msra.mxu0 0.0
        %558 = vmatprep.subr.mxu0 0.0
        %559 = vmatpush2.msra.mxu0 0.0
        %560 = vmatprep.subr.mxu0 0.0
        %561 = vmatpush2.msra.mxu0 0.0
        %562 = vmatprep.subr.mxu0 0.0
        %563 = vmatpush2.msra.mxu0 0.0
        %564 = vmatprep.subr.mxu0 0.0
        %565 = vmatpush2.msra.mxu0 0.0
        %566 = vmatprep.subr.mxu0 0.0
        %567 = vmatpush2.msra.mxu0 0.0
        %568 = vmatprep.subr.mxu0 0.0
        %569 = vmatpush2.msra.mxu0 0.0
        %570 = vmatprep.subr.mxu0 0.0
        %571 = vmatpush2.msra.mxu0 0.0
        %572 = vmatprep.subr.mxu0 0.0
        %573 = vmatpush2.msra.mxu0 0.0
        %574 = vmatprep.subr.mxu0 0.0
        %575 = vmatpush2.msra.mxu0 0.0
        %576 = vmatprep.subr.mxu0 0.0
        %577 = vmatpush2.msra.mxu0 0.0
        %578 = vmatprep.mubr.f32.mxu0 0.0
        %579 = vmatmul.mubr.f32.gmra.mxu0 %v503
        %v580 = vpop.f32.mrf.mxu0
        %v581 = vadd.f32 %v484, %v580
        %v582 = vpop.f32.mrf.mxu0
        %583 = vmatprep.mubr.f32.mxu0 0.0
        %584 = vmatmul.mubr.f32.gmra.mxu0 %v506
        %v585 = vpop.f32.mrf.mxu0
        %v586 = vadd.f32 %v489, %v585
        %v587 = vpop.f32.mrf.mxu0
        %588 = vmatprep.mubr.f32.mxu0 0.0
        %589 = vmatmul.mubr.f32.gmra.mxu0 %v509
        %v590 = vpop.f32.mrf.mxu0
        %v591 = vadd.f32 %v494, %v590
        %v592 = vpop.f32.mrf.mxu0
        %593 = vmatprep.mubr.f32.mxu0 0.0
        %594 = vmatmul.mubr.f32.gmra.mxu0 %v512
        %v595 = vpop.f32.mrf.mxu0
        %v596 = vadd.f32 %v499, %v595
        %v597 = vpop.f32.mrf.mxu0
        %598 = vdwg.mxu0
        %v599 = vmax.f32 %v581, 0.0
        %v600 = vmax.f32 %v586, 0.0
        %v601 = vmax.f32 %v591, 0.0
        %v602 = vmax.f32 %v596, 0.0
        %603 = vst [vmem:[%s367] sm:$0xff] %v599
        %604 = vst [vmem:[%s367 + $0x8] sm:$0xff] %v600
        %605 = vst [vmem:[%s367 + $0x10] sm:$0xff] %v601
        %606 = vst [vmem:[%s367 + $0x18] sm:$0xff] %v602
        %s607 = sand.u32 %s192, 1
        %s608 = scalar_lea.sflag [#allocation7], %s607
        %s609 = sand.u32 %s192, 1
        %s610 = smul.addr %s609, 32
        %s611 = scalar_lea.vmem [#allocation11], %s610
        // Predicated region
        $region53: #{tpu_custom_call.1} parent=39 // pred_check
          %p612 = pneg %p202
        $region54: #{tpu_custom_call.1} parent=39 // pred_check_branch
          %614 = sbr.rel (%p612) target = $region56
        $region55: #{tpu_custom_call.1} parent=39 // pred_region
          %s616 = ssub.s32 512, 512
          %617 = vsyncadd %s608, %s616
          %s618 = smul.addr %s36, 8
          %s619 = sadd.s32 %s37, %s618
          %s620 = smul.addr %s619, 128
          %s621 = scalar_lea.hbm %s6, %s620
          %s622 = sshll.u32 %s611, 4
          %s623 = int_to_ptr.vmem [resolvable:$true] %s622
          %628 = dma.vmem_to_hbm [thread:$0]  %s623, 512, %s621, %s608, 128, 256, 8
        $region56: #{tpu_custom_call.1} parent=39 // pred_fallthru
          _
      $region40: #{tpu_custom_call.1} parent=5 // pred_fallthru
        _
      %p629 = scmp.le.s32.totalorder 2, %s27
      // Predicated region
      $region57: #{tpu_custom_call.1} parent=5 // pred_check
        %p630 = pneg %p629
      $region58: #{tpu_custom_call.1} parent=5 // pred_check_branch
        %632 = sbr.rel (%p630) target = $region60
      $region59: #{tpu_custom_call.1} parent=5 // pred_region
        %s633 = ssub.s32 %s27, 2
        // Predicated region
        $region61: #{tpu_custom_call.1} parent=59 // pred_check
          %p634 = pneg %p208
        $region62: #{tpu_custom_call.1} parent=59 // pred_check_branch
          %636 = sbr.rel (%p634) target = $region64
        $region63: #{tpu_custom_call.1} parent=59 // pred_region
          %s637 = sand.u32 %s193, 1
          %s638 = scalar_lea.sflag [#allocation7], %s637
          %s639 = sand.u32 %s193, 1
          %s640 = smul.addr %s639, 32
          %s641 = scalar_lea.vmem [#allocation11], %s640
          %642 = dma.done %s638, 512
        $region64: #{tpu_custom_call.1} parent=59 // pred_fallthru
          _
      $region60: #{tpu_custom_call.1} parent=5 // pred_fallthru
        _
    $region6: #{tpu_custom_call.1} parent=1 // loop_footer
      %s31 = sadd.s32 1, %s27
    $region7: #{tpu_custom_call.1} parent=1 // loop_footer_branch
      %26 = sbr.rel target = $region3
    $region8: #{tpu_custom_call.1} parent=1 // loop_exit
      _
    %643 = vsyncpa [#allocation6], 1
    %s644 = scalar_lea.sflag [#allocation6], 1
    %645 = vsyncpa %s644, 1
    %646 = vsyncpa [#allocation9], 1
    %s647 = scalar_lea.sflag [#allocation9], 1
    %648 = vsyncpa %s647, 1
    %649 = vsyncpa [#allocation7], 1
    %s650 = scalar_lea.sflag [#allocation7], 1
    %651 = vsyncpa %s650, 1

</llo_original>
